<compile_context>
chip_gen: v7x
topology: tpu7x:2x2x1
jax: 0.10.0
libtpu: 0.0.40
codegen_flags: <defaults>
</compile_context>

<pallas_src>
import functools

import jax
import jax.numpy as jnp
from jax import lax
from jax.experimental import pallas as pl
from jax.experimental.pallas import tpu as pltpu

_LANES = 128
_SUBLANES = 8
_CHUNK = 64  # rows per inner compute slice (multiple of 32 -> f32/bf16/int8 safe)


def _cdiv(a, b):
    return -(-a // b)


def _round_up(x, m):
    return _cdiv(x, m) * m


def _embedding_loss_kernel(pred_ref, gt_ref, out_ref, *, tb, grid, full_rows, part_cols):
    """One grid step: (tb, 128) tile -> (1, 8, 128) partial sums of g*x - softplus(x).

    Statics:
      tb        : rows per block (multiple of _CHUNK).
      grid      : number of grid steps.
      full_rows : fully-valid rows in the LAST block (0..tb).
      part_cols : valid lanes in the single partially-valid row of the last
                  block (0 if none).  Only the last block ever needs masking.
    """
    nchunks = tb // _CHUNK

    def chunk_term(c):
        r0 = pl.multiple_of(c * _CHUNK, _CHUNK)
        x = pred_ref[pl.ds(r0, _CHUNK), :].astype(jnp.float32)
        t = gt_ref[pl.ds(r0, _CHUNK), :].astype(jnp.float32)
        g = 0.5 * jnp.tanh(0.5 * t) + 0.5                      # sigmoid: 1 EUP op
        sp = jnp.maximum(x, 0.0) + jnp.log(1.0 + jnp.exp(-jnp.abs(x)))  # softplus: exp+log
        return g * x - sp                                       # (CHUNK, 128)

    def fold(term):
        # (CHUNK,128) -> (8,128): layout-preserving reshape + pure vreg adds (VPU).
        return term.reshape(_CHUNK // _SUBLANES, _SUBLANES, _LANES).sum(axis=0)

    def body(c, acc):
        return acc + fold(chunk_term(c))

    zero = jnp.zeros((_SUBLANES, _LANES), jnp.float32)

    def full_block():
        return lax.fori_loop(0, nchunks, body, zero)

    def last_block():
        n_full = full_rows // _CHUNK              # static
        rem_rows = full_rows - n_full * _CHUNK    # static, < _CHUNK
        acc = lax.fori_loop(0, n_full, body, zero) if n_full > 0 else zero
        if rem_rows > 0 or part_cols > 0:
            # Single masked chunk; rows past the valid region (stale/padded) are
            # zeroed by the select, so their values never matter.
            term = chunk_term(n_full)
            row = lax.broadcasted_iota(jnp.int32, (_CHUNK, _LANES), 0)
            valid = row < rem_rows
            if part_cols > 0:
                col = lax.broadcasted_iota(jnp.int32, (_CHUNK, _LANES), 1)
                valid = jnp.logical_or(
                    valid, jnp.logical_and(row == rem_rows, col < part_cols))
            acc = acc + fold(jnp.where(valid, term, 0.0))
        return acc

    needs_mask = (full_rows < tb) or (part_cols > 0)

    if not needs_mask:
        out_ref[...] = full_block()[None]
    elif grid == 1:
        out_ref[...] = last_block()[None]
    else:
        is_last = pl.program_id(0) == (grid - 1)

        @pl.when(jnp.logical_not(is_last))
        def _():
            out_ref[...] = full_block()[None]

        @pl.when(is_last)
        def _():
            out_ref[...] = last_block()[None]


def embedding_loss(pred, gt, *, max_tb=8192):
    """Pallas TPU equivalent of EmbeddingLoss.forward(pred, gt) -> scalar f32."""
    assert pred.shape == gt.shape, (pred.shape, gt.shape)
    n = int(pred.size)
    assert n > 0

    max_tb = max(_CHUNK, (int(max_tb) // _CHUNK) * _CHUNK)

    rows = _cdiv(n, _LANES)
    c_valid = n - (rows - 1) * _LANES            # valid lanes in the last row, (0,128]
    lane_aligned = (c_valid == _LANES)

    # Balanced tiling: cap waste per block, keep tb a multiple of _CHUNK, and
    # prefer >= 2 (even) grid steps so v7x can split the parallel axis across
    # both TensorCores.
    tgt = _cdiv(rows, max_tb)
    if rows >= 2 * _CHUNK:
        tgt = max(tgt, 2)
        if tgt % 2:
            tgt += 1
    tb = _round_up(_cdiv(rows, tgt), _CHUNK)
    grid = _cdiv(rows, tb)

    zero_copy = lane_aligned and tb <= rows
    if zero_copy:
        # Free reshape, no HBM copy; ragged last block handled in-kernel.
        arr_rows = rows

        def _prep(a):
            return a.reshape(arr_rows, _LANES)
    else:
        # Small or lane-unaligned input: pad with zeros (values are masked in
        # the kernel, so the fill value is irrelevant).
        # NOTE: jnp.pad materializes a copy; only hit when n % 128 != 0 or the
        # input is tiny — large lane-aligned inputs take the zero-copy path.
        arr_rows = grid * tb
        pad = arr_rows * _LANES - n

        def _prep(a):
            return jnp.pad(a.reshape(-1), (0, pad)).reshape(arr_rows, _LANES)

    # Static description of the (only) partially-valid block: the last one.
    if lane_aligned:
        full_rows = rows - (grid - 1) * tb
        part_cols = 0
    else:
        full_rows = (rows - 1) - (grid - 1) * tb
        part_cols = c_valid
    assert 0 <= full_rows <= tb
    assert not (part_cols > 0 and full_rows >= tb)

    kernel = functools.partial(
        _embedding_loss_kernel, tb=tb, grid=grid, full_rows=full_rows, part_cols=part_cols
    )

    itemsize = max(jnp.dtype(pred.dtype).itemsize, jnp.dtype(gt.dtype).itemsize)

    partials = pl.pallas_call(
        kernel,
        out_shape=jax.ShapeDtypeStruct((grid, _SUBLANES, _LANES), jnp.float32),
        grid_spec=pltpu.PrefetchScalarGridSpec(
            num_scalar_prefetch=0,
            grid=(grid,),
            in_specs=[
                pl.BlockSpec((tb, _LANES), lambda i: (i, 0)),
                pl.BlockSpec((tb, _LANES), lambda i: (i, 0)),
            ],
            out_specs=pl.BlockSpec((1, _SUBLANES, _LANES), lambda i: (i, 0, 0)),
        ),
        compiler_params=pltpu.CompilerParams(
            dimension_semantics=("parallel",),       # independent partials -> both TCs on v7x
            vmem_limit_bytes=32 * 1024 * 1024,       # 16 MiB of f32 I/O buffers at tb=8192, safe on v5e too
        ),
        cost_estimate=pl.CostEstimate(
            flops=6 * n,
            transcendentals=3 * n,
            bytes_accessed=2 * n * itemsize + grid * _SUBLANES * _LANES * 4,
        ),
    )(_prep(pred), _prep(gt))

    # Tiny final reduce + mean/negate in XLA; divide by the TRUE element count.
    return -jnp.sum(partials) / jnp.float32(n)


def embedding_loss_ref(pred, gt):
    p = jax.nn.sigmoid(pred.astype(jnp.float32))
    g = jax.nn.sigmoid(gt.astype(jnp.float32))
    return -jnp.mean(g * jnp.log(p) + (1.0 - g) * jnp.log(1.0 - p))


if __name__ == "__main__":
    key = jax.random.PRNGKey(0)
    k1, k2, k3, k4, k5, k6, k7, k8 = jax.random.split(key, 8)

    # Case 1: small aligned (B, D) = (16, 128) -> single padded block, row-masked tail.
    pred = jax.random.normal(k1, (16, 128), dtype=jnp.float32)
    gt = jax.random.normal(k2, (16, 128), dtype=jnp.float32)
    loss = embedding_loss(pred, gt)
    jax.block_until_ready(loss)
    assert jnp.allclose(loss, embedding_loss_ref(pred, gt), rtol=1e-5, atol=1e-5), loss

    # Case 2: lane-unaligned (10, 50) -> padded path + row/column-masked tail chunk.
    pred2 = jax.random.normal(k3, (10, 50), dtype=jnp.float32)
    gt2 = jax.random.normal(k4, (10, 50), dtype=jnp.float32)
    loss2 = embedding_loss(pred2, gt2)
    jax.block_until_ready(loss2)
    assert jnp.allclose(loss2, embedding_loss_ref(pred2, gt2), rtol=1e-5, atol=1e-5), loss2

    # Case 3: lane-aligned (137, 128) -> zero-copy path, 2 grid blocks, ragged last block.
    pred3 = jax.random.normal(k5, (137, 128), dtype=jnp.float32)
    gt3 = jax.random.normal(k6, (137, 128), dtype=jnp.float32)
    loss3 = embedding_loss(pred3, gt3)
    jax.block_until_ready(loss3)
    assert jnp.allclose(loss3, embedding_loss_ref(pred3, gt3), rtol=1e-5, atol=1e-5), loss3

    # Case 4: bf16 inputs (streamed narrow, up-cast to f32 in VMEM), zero-copy, grid=2.
    pred4 = jax.random.normal(k7, (256, 128), dtype=jnp.float32).astype(jnp.bfloat16)
    gt4 = jax.random.normal(k8, (256, 128), dtype=jnp.float32).astype(jnp.bfloat16)
    loss4 = embedding_loss(pred4, gt4)
    jax.block_until_ready(loss4)
    assert jnp.allclose(loss4, embedding_loss_ref(pred4, gt4), rtol=1e-4, atol=1e-4), loss4

    print("KERNEL_OK")
</pallas_src>

<mosaic_0001>
module attributes {stable_mosaic.version = 11 : i64} {
  func.func @_embedding_loss_kernel(%arg0: i32, %arg1: memref<64x128xf32, #tpu.memory_space<vmem>>, %arg2: memref<64x128xf32, #tpu.memory_space<vmem>>, %arg3: memref<1x8x128xf32, #tpu.memory_space<vmem>>) attributes {dimension_semantics = [#tpu.dimension_semantics<parallel>], iteration_bounds = array<i64: 1>, scalar_prefetch = 0 : i64, scratch_operands = 0 : i64, tpu.core_type = #tpu.core_type<tc>, window_params = [{transform_indices = @transform_0, window_bounds = array<i64: 64, 128>}, {transform_indices = @transform_1, window_bounds = array<i64: 64, 128>}, {transform_indices = @transform_2, window_bounds = array<i64: 1, 8, 128>}]} {
    %cst = arith.constant 0.000000e+00 : f32
    %0 = vector.broadcast %cst : f32 to vector<8x128xf32>
    %c0_i32 = arith.constant 0 : i32
    %1 = tpu.assume_multiple %c0_i32, 64 : i32
    %2 = arith.index_cast %1 : i32 to index
    %c0 = arith.constant 0 : index
    %3 = vector.load %arg1[%2, %c0] : memref<64x128xf32, #tpu.memory_space<vmem>>, vector<64x128xf32>
    %4 = arith.index_cast %1 : i32 to index
    %c0_0 = arith.constant 0 : index
    %5 = vector.load %arg2[%4, %c0_0] : memref<64x128xf32, #tpu.memory_space<vmem>>, vector<64x128xf32>
    %cst_1 = arith.constant 5.000000e-01 : f32
    %6 = vector.broadcast %cst_1 : f32 to vector<64x128xf32>
    %7 = arith.mulf %6, %5 : vector<64x128xf32>
    %8 = math.tanh %7 : vector<64x128xf32>
    %cst_2 = arith.constant 5.000000e-01 : f32
    %9 = vector.broadcast %cst_2 : f32 to vector<64x128xf32>
    %10 = arith.mulf %9, %8 : vector<64x128xf32>
    %cst_3 = arith.constant 5.000000e-01 : f32
    %11 = vector.broadcast %cst_3 : f32 to vector<64x128xf32>
    %12 = arith.addf %10, %11 : vector<64x128xf32>
    %cst_4 = arith.constant 0.000000e+00 : f32
    %13 = vector.broadcast %cst_4 : f32 to vector<64x128xf32>
    %14 = arith.maximumf %3, %13 : vector<64x128xf32>
    %15 = math.absf %3 : vector<64x128xf32>
    %cst_5 = arith.constant 0.000000e+00 : f32
    %16 = vector.broadcast %cst_5 : f32 to vector<64x128xf32>
    %17 = arith.subf %16, %15 : vector<64x128xf32>
    %18 = math.exp %17 : vector<64x128xf32>
    %cst_6 = arith.constant 1.000000e+00 : f32
    %19 = vector.broadcast %cst_6 : f32 to vector<64x128xf32>
    %20 = arith.addf %19, %18 : vector<64x128xf32>
    %21 = math.log %20 : vector<64x128xf32>
    %22 = arith.addf %14, %21 : vector<64x128xf32>
    %23 = arith.mulf %12, %3 : vector<64x128xf32>
    %24 = arith.subf %23, %22 : vector<64x128xf32>
    %25 = tpu.iota {dimensions = array<i32: 0>} : vector<64x128xi32>
    %c16_i32 = arith.constant 16 : i32
    %26 = vector.broadcast %c16_i32 : i32 to vector<64x128xi32>
    %27 = arith.cmpi slt, %25, %26 : vector<64x128xi32>
    %cst_7 = arith.constant 0.000000e+00 : f32
    %28 = vector.broadcast %cst_7 : f32 to vector<64x128xf32>
    %29 = arith.select %27, %24, %28 : vector<64x128xi1>, vector<64x128xf32>
    %30 = vector.shape_cast %29 : vector<64x128xf32> to vector<8x8x128xf32>
    %cst_8 = arith.constant dense<0.000000e+00> : vector<8x128xf32>
    %31 = vector.multi_reduction <add>, %30, %cst_8 [0] : vector<8x8x128xf32> to vector<8x128xf32>
    %32 = arith.addf %0, %31 : vector<8x128xf32>
    %33 = vector.shape_cast %32 : vector<8x128xf32> to vector<1x8x128xf32>
    %c0_9 = arith.constant 0 : index
    %c0_10 = arith.constant 0 : index
    %c0_11 = arith.constant 0 : index
    %34 = vector.load %arg3[%c0_9, %c0_10, %c0_11] : memref<1x8x128xf32, #tpu.memory_space<vmem>>, vector<1x8x128xf32>
    tpu.vector_store %arg3[%c0_9, %c0_10, %c0_11], %33 {strides = array<i32>} : memref<1x8x128xf32, #tpu.memory_space<vmem>>, vector<1x8x128xf32>,
    return
  }
  func.func @transform_0(%arg0: i32) -> (i32, i32) {
    %c0_i32 = arith.constant 0 : i32
    %c0_i32_0 = arith.constant 0 : i32
    return %arg0, %c0_i32 : i32, i32
  }
  func.func @transform_1(%arg0: i32) -> (i32, i32) {
    %c0_i32 = arith.constant 0 : i32
    %c0_i32_0 = arith.constant 0 : i32
    return %arg0, %c0_i32 : i32, i32
  }
  func.func @transform_2(%arg0: i32) -> (i32, i32, i32) {
    %c0_i32 = arith.constant 0 : i32
    %c0_i32_0 = arith.constant 0 : i32
    %c0_i32_1 = arith.constant 0 : i32
    return %arg0, %c0_i32, %c0_i32_0 : i32, i32, i32
  }
}

</mosaic_0001>

<llo_original>
// kernel: tpu_custom_call.1
$region0: #{tpu_custom_call.1}
  #allocation0 [shape = 'u32[]', space=smem, size = 0x4, offset = 0x4, fixed_abs, tag = 'smem constant byte address 0x4 - core index']
  #allocation1 [shape = 'u32[144,128]{1,0:T(1,128)}', space=vmem, size = 0x12000, scoped, tag = 'internal scratch']
  %s0 = inlined_call_operand.hbm [shape: f32[64,128], index: 0, kind: input, shape index: {}]
  %s1 = inlined_call_operand.hbm [shape: f32[64,128], index: 1, kind: input, shape index: {}]
  %s2 = inlined_call_operand.hbm [shape: f32[1,8,128], index: 2, kind: output, shape index: {}]
  %s3 = sld [smem:[#allocation0]]
  $region26: #{tpu_custom_call.1} parent=0
    _
  %s5 = ssub.s32 1, %s3
  %s6 = scalar_select 0, %s5, %s3
  $region1: #{tpu_custom_call.1} parent=0
    #allocation2 [shape = 'u8[32768]{0}', space=vmem, size = 0x8000, scoped, tag = 'input window, operand 0, single buffered']
    #allocation3 [shape = 's32[1]{0}', space=sflag, size = 0x4, scoped, tag = 'scoped memory for tpu_custom_call.1']
    #allocation4 [shape = 's32[1]{0}', space=sflag, size = 0x4, scoped, tag = 'scoped memory for tpu_custom_call.1']
    #allocation5 [shape = 'u8[32768]{0}', space=vmem, size = 0x8000, scoped, tag = 'input window, operand 1, single buffered']
    #allocation6 [shape = 's32[1]{0}', space=sflag, size = 0x4, scoped, tag = 'scoped memory for tpu_custom_call.1']
    #allocation7 [shape = 'u8[4096]{0}', space=vmem, size = 0x1000, scoped, tag = 'output window, operand 0, single buffered']
    %7 = vsyncpa [#allocation3], 0
    %8 = vsyncpa [#allocation6], 0
    %9 = vsyncpa [#allocation4], 0
    // Predicated region
    $region2: #{tpu_custom_call.1} parent=1 // pred_check
      _
    $region3: #{tpu_custom_call.1} parent=1 // pred_check_branch
      %11 = sbr.rel (0) target = $region5
    $region4: #{tpu_custom_call.1} parent=1 // pred_region
      %s13 = ssub.s32 1024, 1024
      %14 = vsyncadd [#allocation3], %s13
      %s15 = sshll.u32 [#allocation2], 4
      %s16 = int_to_ptr.vmem [resolvable:$true] %s15
      %21 = dma.hbm_to_vmem [thread:$0]  %s0, 1024, %s16, [#allocation3], 128, 128, 8
    $region5: #{tpu_custom_call.1} parent=1 // pred_fallthru
      _
    // Predicated region
    $region6: #{tpu_custom_call.1} parent=1 // pred_check
      _
    $region7: #{tpu_custom_call.1} parent=1 // pred_check_branch
      %23 = sbr.rel (0) target = $region9
    $region8: #{tpu_custom_call.1} parent=1 // pred_region
      %s25 = ssub.s32 1024, 1024
      %26 = vsyncadd [#allocation6], %s25
      %s27 = sshll.u32 [#allocation5], 4
      %s28 = int_to_ptr.vmem [resolvable:$true] %s27
      %33 = dma.hbm_to_vmem [thread:$0]  %s1, 1024, %s28, [#allocation6], 128, 128, 8
    $region9: #{tpu_custom_call.1} parent=1 // pred_fallthru
      _
    // Predicated region
    $region10: #{tpu_custom_call.1} parent=1 // pred_check
      _
    $region11: #{tpu_custom_call.1} parent=1 // pred_check_branch
      %35 = sbr.rel (0) target = $region13
    $region12: #{tpu_custom_call.1} parent=1 // pred_region
      %36 = dma.done [#allocation3], 1024
    $region13: #{tpu_custom_call.1} parent=1 // pred_fallthru
      _
    // Predicated region
    $region14: #{tpu_custom_call.1} parent=1 // pred_check
      _
    $region15: #{tpu_custom_call.1} parent=1 // pred_check_branch
      %38 = sbr.rel (0) target = $region17
    $region16: #{tpu_custom_call.1} parent=1 // pred_region
      %39 = dma.done [#allocation6], 1024
    $region17: #{tpu_custom_call.1} parent=1 // pred_fallthru
      _
    %v40 = vld [vmem:[#allocation2] sm:$0xff]
    %v41 = vld [vmem:[#allocation2 + $0x8] sm:$0xff]
    %v42 = vld [vmem:[#allocation2 + $0x10] sm:$0xff]
    %v43 = vld [vmem:[#allocation2 + $0x18] sm:$0xff]
    %v44 = vld [vmem:[#allocation2 + $0x20] sm:$0xff]
    %v45 = vld [vmem:[#allocation2 + $0x28] sm:$0xff]
    %v46 = vld [vmem:[#allocation2 + $0x30] sm:$0xff]
    %v47 = vld [vmem:[#allocation2 + $0x38] sm:$0xff]
    %v48 = vld [vmem:[#allocation5] sm:$0xff]
    %v49 = vld [vmem:[#allocation5 + $0x8] sm:$0xff]
    %v50 = vld [vmem:[#allocation5 + $0x10] sm:$0xff]
    %v51 = vld [vmem:[#allocation5 + $0x18] sm:$0xff]
    %v52 = vld [vmem:[#allocation5 + $0x20] sm:$0xff]
    %v53 = vld [vmem:[#allocation5 + $0x28] sm:$0xff]
    %v54 = vld [vmem:[#allocation5 + $0x30] sm:$0xff]
    %v55 = vld [vmem:[#allocation5 + $0x38] sm:$0xff]
    %v56 = vmul.f32 %v48, 0.5
    %v57 = vmul.f32 %v49, 0.5
    %v58 = vmul.f32 %v50, 0.5
    %v59 = vmul.f32 %v51, 0.5
    %v60 = vmul.f32 %v52, 0.5
    %v61 = vmul.f32 %v53, 0.5
    %v62 = vmul.f32 %v54, 0.5
    %v63 = vmul.f32 %v55, 0.5
    %v64 = vtanh.pop %v56
    %v65 = vtanh.pop %v57
    %v66 = vtanh.pop %v58
    %v67 = vtanh.pop %v59
    %v68 = vtanh.pop %v60
    %v69 = vtanh.pop %v61
    %v70 = vtanh.pop %v62
    %v71 = vtanh.pop %v63
    %v72 = vmul.f32 %v64, 0.5
    %v73 = vmul.f32 %v65, 0.5
    %v74 = vmul.f32 %v66, 0.5
    %v75 = vmul.f32 %v67, 0.5
    %v76 = vmul.f32 %v68, 0.5
    %v77 = vmul.f32 %v69, 0.5
    %v78 = vmul.f32 %v70, 0.5
    %v79 = vmul.f32 %v71, 0.5
    %v80 = vadd.f32 %v72, 0.5
    %v81 = vadd.f32 %v73, 0.5
    %v82 = vadd.f32 %v74, 0.5
    %v83 = vadd.f32 %v75, 0.5
    %v84 = vadd.f32 %v76, 0.5
    %v85 = vadd.f32 %v77, 0.5
    %v86 = vadd.f32 %v78, 0.5
    %v87 = vadd.f32 %v79, 0.5
    %v88 = vmax.f32 %v40, 0.0
    %v89 = vmax.f32 %v41, 0.0
    %v90 = vmax.f32 %v42, 0.0
    %v91 = vmax.f32 %v43, 0.0
    %v92 = vmax.f32 %v44, 0.0
    %v93 = vmax.f32 %v45, 0.0
    %v94 = vmax.f32 %v46, 0.0
    %v95 = vmax.f32 %v47, 0.0
    %v96 = vand.u32 2147483647, %v40
    %v97 = vand.u32 2147483647, %v41
    %v98 = vand.u32 2147483647, %v42
    %v99 = vand.u32 2147483647, %v43
    %v100 = vand.u32 2147483647, %v44
    %v101 = vand.u32 2147483647, %v45
    %v102 = vand.u32 2147483647, %v46
    %v103 = vand.u32 2147483647, %v47
    %v104 = vsub.f32 0.0, %v96
    %v105 = vsub.f32 0.0, %v97
    %v106 = vsub.f32 0.0, %v98
    %v107 = vsub.f32 0.0, %v99
    %v108 = vsub.f32 0.0, %v100
    %v109 = vsub.f32 0.0, %v101
    %v110 = vsub.f32 0.0, %v102
    %v111 = vsub.f32 0.0, %v103
    %v112 = vmul.f32 %v104, 1.442695
    %v113 = vpow.pop %v112
    %v114 = vmul.f32 %v105, 1.442695
    %v115 = vpow.pop %v114
    %v116 = vmul.f32 %v106, 1.442695
    %v117 = vpow.pop %v116
    %v118 = vmul.f32 %v107, 1.442695
    %v119 = vpow.pop %v118
    %v120 = vmul.f32 %v108, 1.442695
    %v121 = vpow.pop %v120
    %v122 = vmul.f32 %v109, 1.442695
    %v123 = vpow.pop %v122
    %v124 = vmul.f32 %v110, 1.442695
    %v125 = vpow.pop %v124
    %v126 = vmul.f32 %v111, 1.442695
    %v127 = vpow.pop %v126
    %v128 = vadd.f32 %v113, 1.0
    %v129 = vadd.f32 %v115, 1.0
    %v130 = vadd.f32 %v117, 1.0
    %v131 = vadd.f32 %v119, 1.0
    %v132 = vadd.f32 %v121, 1.0
    %v133 = vadd.f32 %v123, 1.0
    %v134 = vadd.f32 %v125, 1.0
    %v135 = vadd.f32 %v127, 1.0
    %v136 = vlog2.pop %v128
    %v137 = vmul.f32 %v136, 0.6931472
    %v138 = vlog2.pop %v129
    %v139 = vmul.f32 %v138, 0.6931472
    %v140 = vlog2.pop %v130
    %v141 = vmul.f32 %v140, 0.6931472
    %v142 = vlog2.pop %v131
    %v143 = vmul.f32 %v142, 0.6931472
    %v144 = vlog2.pop %v132
    %v145 = vmul.f32 %v144, 0.6931472
    %v146 = vlog2.pop %v133
    %v147 = vmul.f32 %v146, 0.6931472
    %v148 = vlog2.pop %v134
    %v149 = vmul.f32 %v148, 0.6931472
    %v150 = vlog2.pop %v135
    %v151 = vmul.f32 %v150, 0.6931472
    %v152 = vadd.f32 %v88, %v137
    %v153 = vadd.f32 %v89, %v139
    %v154 = vadd.f32 %v90, %v141
    %v155 = vadd.f32 %v91, %v143
    %v156 = vadd.f32 %v92, %v145
    %v157 = vadd.f32 %v93, %v147
    %v158 = vadd.f32 %v94, %v149
    %v159 = vadd.f32 %v95, %v151
    %v160 = vmul.f32 %v80, %v40
    %v161 = vmul.f32 %v81, %v41
    %v162 = vmul.f32 %v82, %v42
    %v163 = vmul.f32 %v83, %v43
    %v164 = vmul.f32 %v84, %v44
    %v165 = vmul.f32 %v85, %v45
    %v166 = vmul.f32 %v86, %v46
    %v167 = vmul.f32 %v87, %v47
    %v168 = vsub.f32 %v160, %v152
    %v169 = vsub.f32 %v161, %v153
    %v170 = vsub.f32 %v162, %v154
    %v171 = vsub.f32 %v163, %v155
    %v172 = vsub.f32 %v164, %v156
    %v173 = vsub.f32 %v165, %v157
    %v174 = vsub.f32 %v166, %v158
    %v175 = vsub.f32 %v167, %v159
    %v176 = vlaneseq
    %v177 = vshrl.u32 %v176, 7
    %v178 = vadd.s32 %v177, 8
    %v179 = vadd.s32 %v177, 16
    %v180 = vadd.s32 %v177, 24
    %v181 = vadd.s32 %v177, 32
    %v182 = vadd.s32 %v177, 40
    %v183 = vadd.s32 %v177, 48
    %v184 = vadd.s32 %v177, 56
    %vm185 = vcmp.lt.s32.totalorder %v177, 16
    %vm186 = vcmp.lt.s32.totalorder %v178, 16
    %vm187 = vcmp.lt.s32.totalorder %v179, 16
    %vm188 = vcmp.lt.s32.totalorder %v180, 16
    %vm189 = vcmp.lt.s32.totalorder %v181, 16
    %vm190 = vcmp.lt.s32.totalorder %v182, 16
    %vm191 = vcmp.lt.s32.totalorder %v183, 16
    %vm192 = vcmp.lt.s32.totalorder %v184, 16
    %v193 = vsel %vm185, %v168, 0.0
    %v194 = vsel %vm186, %v169, 0.0
    %v195 = vsel %vm187, %v170, 0.0
    %v196 = vsel %vm188, %v171, 0.0
    %v197 = vsel %vm189, %v172, 0.0
    %v198 = vsel %vm190, %v173, 0.0
    %v199 = vsel %vm191, %v174, 0.0
    %v200 = vsel %vm192, %v175, 0.0
    %v201 = vadd.f32 %v193, %v194
    %v202 = vadd.f32 %v201, %v195
    %v203 = vadd.f32 %v202, %v196
    %v204 = vadd.f32 %v203, %v197
    %v205 = vadd.f32 %v204, %v198
    %v206 = vadd.f32 %v205, %v199
    %v207 = vadd.f32 %v206, %v200
    %v208 = vadd.f32 %v207, 0.0
    %209 = vst [vmem:[#allocation7] sm:$0xff] %v208
    // Predicated region
    $region18: #{tpu_custom_call.1} parent=1 // pred_check
      _
    $region19: #{tpu_custom_call.1} parent=1 // pred_check_branch
      %211 = sbr.rel (0) target = $region21
    $region20: #{tpu_custom_call.1} parent=1 // pred_region
      %s213 = ssub.s32 128, 128
      %214 = vsyncadd [#allocation4], %s213
      %s216 = sshll.u32 [#allocation7], 4
      %s217 = int_to_ptr.vmem [resolvable:$true] %s216
      %219 = dma.vmem_to_hbm [thread:$0]  %s217, 128, %s2, [#allocation4]
    $region21: #{tpu_custom_call.1} parent=1 // pred_fallthru
      _
    // Predicated region
    $region22: #{tpu_custom_call.1} parent=1 // pred_check
      _
    $region23: #{tpu_custom_call.1} parent=1 // pred_check_branch
      %221 = sbr.rel (0) target = $region25
    $region24: #{tpu_custom_call.1} parent=1 // pred_region
      %222 = dma.done [#allocation4], 128
    $region25: #{tpu_custom_call.1} parent=1 // pred_fallthru
      _
    %223 = vsyncpa [#allocation3], 1
    %224 = vsyncpa [#allocation6], 1
    %225 = vsyncpa [#allocation4], 1

</llo_original>
